<compile_context>
chip_gen: v6e
topology: v6e:2x2x1
jax: 0.10.0
libtpu: 0.0.40
codegen_flags: <defaults>
</compile_context>

<pallas_src>
from functools import partial

import jax
import jax.numpy as jnp
from jax.experimental import pallas as pl
from jax.experimental.pallas import tpu as pltpu


def _round_up(n: int, m: int) -> int:
    return ((n + m - 1) // m) * m


def sonar_kernel(x_ref, w1_ref, b1_ref, w2t_ref, b2_ref, o_ref):
    # fc1: (TB, F) @ (F, H) on the MXU, f32 accumulation (works for f32 or bf16 inputs).
    h = jnp.dot(x_ref[...], w1_ref[...], preferred_element_type=jnp.float32)
    h = jnp.maximum(h + b1_ref[...], 0.0)                 # bias + ReLU (VPU, f32)

    # Transpose so the rest of the epilogue and the store are lane-dense along the batch
    # tile. The (TB, H) -> (H, TB) transpose rides the otherwise-idle XLU slot.
    h_t = h.T                                             # (H, TB), f32

    # fc2: (1, H) @ (H, TB) -> (1, TB), lane-dense result.
    y = jnp.dot(w2t_ref[...], h_t, preferred_element_type=jnp.float32)
    y = y + b2_ref[0, 0]                                  # scalar bias from SMEM

    # Sigmoid in f32 (exp lands on the EUP slot; saturates correctly for large |y|).
    o_ref[...] = (1.0 / (1.0 + jnp.exp(-y))).astype(o_ref.dtype)


@partial(jax.jit, static_argnames=("block_b",))
def sonar_forward(x, w1, b1, w2, b2, *, block_b=8192):
    """x: (B, 60). Returns sigmoid(relu(x @ w1 + b1) @ w2 + b2) of shape (B, 1)."""
    B, F = x.shape
    H = w1.shape[1]

    # Keep the streamed matmul operands in x's dtype (f32 or bf16); tiny epilogue
    # parameters stay in f32. w2 is passed pre-transposed as a (1, H) row.
    w1 = w1.astype(x.dtype)
    b1 = b1.reshape(1, H).astype(jnp.float32)
    w2t = w2.astype(jnp.float32).reshape(1, H)
    b2 = b2.astype(jnp.float32).reshape(1, 1)

    # Batch tile: as large as the budget allows, multiple of 128 (satisfies sublane/lane
    # tiling for both f32 and bf16 and keeps the output slab lane-aligned).
    tb = min(block_b, _round_up(B, 128))
    b_pad = _round_up(B, tb)
    if b_pad != B:
        x = jnp.pad(x, ((0, b_pad - B), (0, 0)))

    out = pl.pallas_call(
        sonar_kernel,
        out_shape=jax.ShapeDtypeStruct((1, b_pad), jnp.float32),
        grid=(b_pad // tb,),
        in_specs=[
            pl.BlockSpec((tb, F), lambda i: (i, 0)),             # x: streamed batch tiles
            pl.BlockSpec((F, H), lambda i: (0, 0)),              # w1: invariant, resident
            pl.BlockSpec((1, H), lambda i: (0, 0)),              # b1: invariant
            pl.BlockSpec((1, H), lambda i: (0, 0)),              # w2^T: invariant
            pl.BlockSpec(memory_space=pltpu.MemorySpace.SMEM),   # b2: scalar in SMEM
        ],
        out_specs=pl.BlockSpec((1, tb), lambda i: (0, i)),        # lane-dense output slab
        compiler_params=pltpu.CompilerParams(
            dimension_semantics=("parallel",),                    # shard batch across TCs (v7x)
        ),
    )(x, w1, b1, w2t, b2)

    # Back to the nn.Linear (B, 1) convention; drop batch padding.
    return out.reshape(b_pad, 1)[:B]


if __name__ == "__main__":
    input_size = 60   # num_features
    hidden_size = 32
    output_size = 1
    batch = 8

    key = jax.random.PRNGKey(0)
    kx, k1, k2, k3, k4 = jax.random.split(key, 5)

    # Deterministic synthetic parameters (PyTorch-Linear-style uniform init).
    bound1 = 1.0 / (input_size ** 0.5)
    bound2 = 1.0 / (hidden_size ** 0.5)
    x = jax.random.normal(kx, (batch, input_size), dtype=jnp.float32)
    w1 = jax.random.uniform(k1, (input_size, hidden_size), jnp.float32, -bound1, bound1)
    b1 = jax.random.uniform(k2, (1, hidden_size), jnp.float32, -bound1, bound1)
    w2 = jax.random.uniform(k3, (hidden_size, output_size), jnp.float32, -bound2, bound2)
    b2 = jax.random.uniform(k4, (1, output_size), jnp.float32, -bound2, bound2)

    # --- f32 path, toy batch (single-tile grid) ---
    out = sonar_forward(x, w1, b1, w2, b2)
    jax.block_until_ready(out)
    ref = jax.nn.sigmoid(jnp.maximum(x @ w1 + b1, 0.0) @ w2 + b2)
    assert out.shape == (batch, output_size)
    assert jnp.allclose(out, ref, atol=1e-5, rtol=1e-5)

    # --- bf16 streaming path, larger batch: exercises multi-tile grid + batch padding ---
    batch2 = 2500
    x2 = jax.random.normal(jax.random.PRNGKey(1), (batch2, input_size), dtype=jnp.float32)
    out2 = sonar_forward(x2.astype(jnp.bfloat16), w1.astype(jnp.bfloat16), b1, w2, b2,
                         block_b=1024)   # tb=1024 -> grid=(3,), padded to 3072 rows
    jax.block_until_ready(out2)
    ref2 = jax.nn.sigmoid(jnp.maximum(x2 @ w1 + b1, 0.0) @ w2 + b2)
    assert out2.shape == (batch2, output_size)
    assert jnp.allclose(out2, ref2, atol=2e-2, rtol=2e-2)

    print("KERNEL_OK")
</pallas_src>

<mosaic_0001>
module attributes {stable_mosaic.version = 11 : i64} {
  func.func @sonar_kernel(%arg0: i32, %arg1: memref<128x60xf32, #tpu.memory_space<vmem>>, %arg2: memref<60x32xf32, #tpu.memory_space<vmem>>, %arg3: memref<1x32xf32, #tpu.memory_space<vmem>>, %arg4: memref<1x32xf32, #tpu.memory_space<vmem>>, %arg5: memref<1x1xf32, #tpu.memory_space<smem>>, %arg6: memref<1x128xf32, #tpu.memory_space<vmem>>) attributes {dimension_semantics = [#tpu.dimension_semantics<parallel>], iteration_bounds = array<i64: 1>, scalar_prefetch = 0 : i64, scratch_operands = 0 : i64, tpu.core_type = #tpu.core_type<tc>, window_params = [{transform_indices = @transform_0, window_bounds = array<i64: 128, 60>}, {pipeline_mode = #tpu.pipeline_mode<synchronous>, transform_indices = @transform_1, window_bounds = array<i64: 60, 32>}, {pipeline_mode = #tpu.pipeline_mode<synchronous>, transform_indices = @transform_2, window_bounds = array<i64: 1, 32>}, {pipeline_mode = #tpu.pipeline_mode<synchronous>, transform_indices = @transform_3, window_bounds = array<i64: 1, 32>}, {transform_indices = @transform_4, window_bounds = array<i64: 1, 1>}, {transform_indices = @transform_5, window_bounds = array<i64: 1, 128>}]} {
    %c0 = arith.constant 0 : index
    %c0_0 = arith.constant 0 : index
    %0 = vector.load %arg1[%c0, %c0_0] : memref<128x60xf32, #tpu.memory_space<vmem>>, vector<128x60xf32>
    %c0_1 = arith.constant 0 : index
    %c0_2 = arith.constant 0 : index
    %1 = vector.load %arg2[%c0_1, %c0_2] : memref<60x32xf32, #tpu.memory_space<vmem>>, vector<60x32xf32>
    %cst = arith.constant dense<0.000000e+00> : vector<128x32xf32>
    %2 = tpu.matmul %0, %1, %cst {dimension_numbers = #tpu.dot_dimension_numbers<[1], [0], [0], [1], [0, 0, 1, 1], [], []>} : vector<128x60xf32>, vector<60x32xf32>, vector<128x32xf32> -> vector<128x32xf32>
    %c0_3 = arith.constant 0 : index
    %c0_4 = arith.constant 0 : index
    %3 = vector.load %arg3[%c0_3, %c0_4] : memref<1x32xf32, #tpu.memory_space<vmem>>, vector<1x32xf32>
    %4 = vector.broadcast %3 : vector<1x32xf32> to vector<128x32xf32>
    %5 = arith.addf %2, %4 : vector<128x32xf32>
    %cst_5 = arith.constant 0.000000e+00 : f32
    %6 = vector.broadcast %cst_5 : f32 to vector<128x32xf32>
    %7 = arith.maximumf %5, %6 : vector<128x32xf32>
    %8 = tpu.transpose %7, [1, 0] : vector<128x32xf32> -> vector<32x128xf32>
    %c0_6 = arith.constant 0 : index
    %c0_7 = arith.constant 0 : index
    %9 = vector.load %arg4[%c0_6, %c0_7] : memref<1x32xf32, #tpu.memory_space<vmem>>, vector<1x32xf32>
    %cst_8 = arith.constant dense<0.000000e+00> : vector<1x128xf32>
    %10 = tpu.matmul %9, %8, %cst_8 {dimension_numbers = #tpu.dot_dimension_numbers<[1], [0], [0], [1], [0, 0, 1, 1], [], []>} : vector<1x32xf32>, vector<32x128xf32>, vector<1x128xf32> -> vector<1x128xf32>
    %c0_9 = arith.constant 0 : index
    %c0_10 = arith.constant 0 : index
    %11 = memref.load %arg5[%c0_9, %c0_10] : memref<1x1xf32, #tpu.memory_space<smem>>
    %12 = vector.broadcast %11 : f32 to vector<1x128xf32>
    %13 = arith.addf %10, %12 : vector<1x128xf32>
    %cst_11 = arith.constant 0.000000e+00 : f32
    %14 = vector.broadcast %cst_11 : f32 to vector<1x128xf32>
    %15 = arith.subf %14, %13 : vector<1x128xf32>
    %16 = math.exp %15 : vector<1x128xf32>
    %cst_12 = arith.constant 1.000000e+00 : f32
    %17 = vector.broadcast %cst_12 : f32 to vector<1x128xf32>
    %18 = arith.addf %17, %16 : vector<1x128xf32>
    %cst_13 = arith.constant 1.000000e+00 : f32
    %19 = vector.broadcast %cst_13 : f32 to vector<1x128xf32>
    %20 = arith.divf %19, %18 : vector<1x128xf32>
    %c0_14 = arith.constant 0 : index
    %c0_15 = arith.constant 0 : index
    %21 = vector.load %arg6[%c0_14, %c0_15] : memref<1x128xf32, #tpu.memory_space<vmem>>, vector<1x128xf32>
    tpu.vector_store %arg6[%c0_14, %c0_15], %20 {strides = array<i32>} : memref<1x128xf32, #tpu.memory_space<vmem>>, vector<1x128xf32>,
    return
  }
  func.func @transform_0(%arg0: i32) -> (i32, i32) {
    %c0_i32 = arith.constant 0 : i32
    %c0_i32_0 = arith.constant 0 : i32
    return %arg0, %c0_i32 : i32, i32
  }
  func.func @transform_1(%arg0: i32) -> (i32, i32) {
    %c0_i32 = arith.constant 0 : i32
    %c0_i32_0 = arith.constant 0 : i32
    %c0_i32_1 = arith.constant 0 : i32
    return %c0_i32, %c0_i32_0 : i32, i32
  }
  func.func @transform_2(%arg0: i32) -> (i32, i32) {
    %c0_i32 = arith.constant 0 : i32
    %c0_i32_0 = arith.constant 0 : i32
    %c0_i32_1 = arith.constant 0 : i32
    return %c0_i32, %c0_i32_0 : i32, i32
  }
  func.func @transform_3(%arg0: i32) -> (i32, i32) {
    %c0_i32 = arith.constant 0 : i32
    %c0_i32_0 = arith.constant 0 : i32
    %c0_i32_1 = arith.constant 0 : i32
    return %c0_i32, %c0_i32_0 : i32, i32
  }
  func.func @transform_4(%arg0: i32) -> (i32, i32) {
    %c0_i32 = arith.constant 0 : i32
    %c0_i32_0 = arith.constant 0 : i32
    %c0_i32_1 = arith.constant 0 : i32
    return %c0_i32, %c0_i32_0 : i32, i32
  }
  func.func @transform_5(%arg0: i32) -> (i32, i32) {
    %c0_i32 = arith.constant 0 : i32
    %c0_i32_0 = arith.constant 0 : i32
    return %c0_i32, %arg0 : i32, i32
  }
}

</mosaic_0001>

<llo_original>
// kernel: sonar_forward.1
$region0: #{sonar_forward.1}
  #allocation0 [shape = 'u32[]', space=smem, size = 0x4, offset = 0x4, fixed_abs, tag = 'smem constant byte address 0x4 - core index']
  #allocation1 [shape = 'u32[144,128]{1,0:T(1,128)}', space=vmem, size = 0x12000, scoped, tag = 'internal scratch']
  #allocation2 [shape = 'f32[1,1]{1,0:T(1,128)S(6)}', space=smem, size = 0x200, scoped, tag = 'scoped memory for sonar_forward.1']
  %s0 = inlined_call_operand.vmem [shape: f32[128,60], index: 0, kind: input, shape index: {}]
  %s1 = inlined_call_operand.vmem [shape: f32[60,32], index: 1, kind: input, shape index: {}]
  %s2 = inlined_call_operand.vmem [shape: f32[1,32], index: 2, kind: input, shape index: {}]
  %s3 = inlined_call_operand.vmem [shape: f32[1,32], index: 3, kind: input, shape index: {}]
  %s4 = inlined_call_operand.<no memory space> [shape: f32[1,1], index: 4, kind: input, shape index: {}]
  %s5 = inlined_call_operand.vmem [shape: f32[1,128], index: 5, kind: output, shape index: {}]
  %s6 = sld [smem:[#allocation0]]
  $region30: #{sonar_forward.1} parent=0
    _
  %s8 = ssub.s32 1, %s6
  %s9 = scalar_select 0, %s8, %s6
  %10 = sst [smem:[#allocation2]] %s4
  // Predicated region
  $region2: #{sonar_forward.1} parent=0 // pred_check
    _
  $region3: #{sonar_forward.1} parent=0 // pred_check_branch
    %12 = sbr.rel (0) target = $region5
  $region4: #{sonar_forward.1} parent=0 // pred_region
    _
  $region5: #{sonar_forward.1} parent=0 // pred_fallthru
    _
  // Predicated region
  $region6: #{sonar_forward.1} parent=0 // pred_check
    _
  $region7: #{sonar_forward.1} parent=0 // pred_check_branch
    %14 = sbr.rel (0) target = $region9
  $region8: #{sonar_forward.1} parent=0 // pred_region
    _
  $region9: #{sonar_forward.1} parent=0 // pred_fallthru
    _
  // Predicated region
  $region10: #{sonar_forward.1} parent=0 // pred_check
    _
  $region11: #{sonar_forward.1} parent=0 // pred_check_branch
    %16 = sbr.rel (0) target = $region13
  $region12: #{sonar_forward.1} parent=0 // pred_region
    _
  $region13: #{sonar_forward.1} parent=0 // pred_fallthru
    _
  // Predicated region
  $region14: #{sonar_forward.1} parent=0 // pred_check
    _
  $region15: #{sonar_forward.1} parent=0 // pred_check_branch
    %18 = sbr.rel (0) target = $region17
  $region16: #{sonar_forward.1} parent=0 // pred_region
    _
  $region17: #{sonar_forward.1} parent=0 // pred_fallthru
    _
  // Predicated region
  $region18: #{sonar_forward.1} parent=0 // pred_check
    _
  $region19: #{sonar_forward.1} parent=0 // pred_check_branch
    %20 = sbr.rel (0) target = $region21
  $region20: #{sonar_forward.1} parent=0 // pred_region
    _
  $region21: #{sonar_forward.1} parent=0 // pred_fallthru
    _
  %v21 = vld [vmem:[%s0] sm:$0xff]
  %v22 = vld [vmem:[%s0 + $0x8] sm:$0xff]
  %v23 = vld [vmem:[%s0 + $0x10] sm:$0xff]
  %v24 = vld [vmem:[%s0 + $0x18] sm:$0xff]
  %v25 = vld [vmem:[%s0 + $0x20] sm:$0xff]
  %v26 = vld [vmem:[%s0 + $0x28] sm:$0xff]
  %v27 = vld [vmem:[%s0 + $0x30] sm:$0xff]
  %v28 = vld [vmem:[%s0 + $0x38] sm:$0xff]
  %v29 = vld [vmem:[%s0 + $0x40] sm:$0xff]
  %v30 = vld [vmem:[%s0 + $0x48] sm:$0xff]
  %v31 = vld [vmem:[%s0 + $0x50] sm:$0xff]
  %v32 = vld [vmem:[%s0 + $0x58] sm:$0xff]
  %v33 = vld [vmem:[%s0 + $0x60] sm:$0xff]
  %v34 = vld [vmem:[%s0 + $0x68] sm:$0xff]
  %v35 = vld [vmem:[%s0 + $0x70] sm:$0xff]
  %v36 = vld [vmem:[%s0 + $0x78] sm:$0xff]
  %v37 = vld [vmem:[%s1] sm:$0xff]
  %v38 = vld [vmem:[%s1 + $0x8] sm:$0xff]
  %v39 = vld [vmem:[%s1 + $0x10] sm:$0xff]
  %v40 = vld [vmem:[%s1 + $0x18] sm:$0xff]
  %v41 = vld [vmem:[%s1 + $0x20] sm:$0xff]
  %v42 = vld [vmem:[%s1 + $0x28] sm:$0xff]
  %v43 = vld [vmem:[%s1 + $0x30] sm:$0xff]
  %v44 = vld [vmem:[%s1 + $0x38] sm:$0xf]
  %v45 = vld [vmem:[%s2] sm:$0x1]
  %v47 = vlaneseq
  %v48 = vshrl.u32 %v47, 7
  %v49 = vsub.s32 0, %v48
  %v50 = vrot.slane %v45, %v49
  %vm52 = vcmask 490496
  %v54 = vsel %vm52, %v21, 0
  %v57 = vsel %vm52, %v22, 0
  %v60 = vsel %vm52, %v23, 0
  %v63 = vsel %vm52, %v24, 0
  %v66 = vsel %vm52, %v25, 0
  %v69 = vsel %vm52, %v26, 0
  %v72 = vsel %vm52, %v27, 0
  %v75 = vsel %vm52, %v28, 0
  %v78 = vsel %vm52, %v29, 0
  %v81 = vsel %vm52, %v30, 0
  %v84 = vsel %vm52, %v31, 0
  %v87 = vsel %vm52, %v32, 0
  %v90 = vsel %vm52, %v33, 0
  %v93 = vsel %vm52, %v34, 0
  %v96 = vsel %vm52, %v35, 0
  %v99 = vsel %vm52, %v36, 0
  %vm101 = vcmask 1043456
  %v103 = vsel %vm101, %v44, 0
  %105 = vmatprep.subr.mxu0 0.0
  %106 = vmatpush1.msra.mxu0 0.0
  %107 = vmatprep.subr.mxu0 0.0
  %108 = vmatpush1.msra.mxu0 0.0
  %109 = vmatprep.subr.mxu0 0.0
  %110 = vmatpush1.msra.mxu0 0.0
  %111 = vmatprep.subr.mxu0 0.0
  %112 = vmatpush1.msra.mxu0 0.0
  %113 = vmatprep.subr.mxu0 0.0
  %114 = vmatpush1.msra.mxu0 0.0
  %115 = vmatprep.subr.mxu0 0.0
  %116 = vmatpush1.msra.mxu0 0.0
  %117 = vmatprep.subr.mxu0 0.0
  %118 = vmatpush1.msra.mxu0 0.0
  %119 = vmatprep.subr.mxu0 0.0
  %120 = vmatpush1.msra.mxu0 0.0
  %121 = vmatprep.subr.mxu0 0.0
  %122 = vmatpush1.msra.mxu0 %v103
  %123 = vmatprep.subr.mxu0 0.0
  %124 = vmatpush1.msra.mxu0 %v43
  %125 = vmatprep.subr.mxu0 0.0
  %126 = vmatpush1.msra.mxu0 %v42
  %127 = vmatprep.subr.mxu0 0.0
  %128 = vmatpush1.msra.mxu0 %v41
  %129 = vmatprep.subr.mxu0 0.0
  %130 = vmatpush1.msra.mxu0 %v40
  %131 = vmatprep.subr.mxu0 0.0
  %132 = vmatpush1.msra.mxu0 %v39
  %133 = vmatprep.subr.mxu0 0.0
  %134 = vmatpush1.msra.mxu0 %v38
  %135 = vmatprep.subr.mxu0 0.0
  %136 = vmatpush1.msra.mxu0 %v37
  %137 = vmatprep.subr.mxu0 0.0
  %138 = vmatpush2.msra.mxu0 0.0
  %139 = vmatprep.subr.mxu0 0.0
  %140 = vmatpush2.msra.mxu0 0.0
  %141 = vmatprep.subr.mxu0 0.0
  %142 = vmatpush2.msra.mxu0 0.0
  %143 = vmatprep.subr.mxu0 0.0
  %144 = vmatpush2.msra.mxu0 0.0
  %145 = vmatprep.subr.mxu0 0.0
  %146 = vmatpush2.msra.mxu0 0.0
  %147 = vmatprep.subr.mxu0 0.0
  %148 = vmatpush2.msra.mxu0 0.0
  %149 = vmatprep.subr.mxu0 0.0
  %150 = vmatpush2.msra.mxu0 0.0
  %151 = vmatprep.subr.mxu0 0.0
  %152 = vmatpush2.msra.mxu0 0.0
  %153 = vmatprep.subr.mxu0 0.0
  %154 = vmatpush2.msra.mxu0 0.0
  %155 = vmatprep.subr.mxu0 0.0
  %156 = vmatpush2.msra.mxu0 0.0
  %157 = vmatprep.subr.mxu0 0.0
  %158 = vmatpush2.msra.mxu0 0.0
  %159 = vmatprep.subr.mxu0 0.0
  %160 = vmatpush2.msra.mxu0 0.0
  %161 = vmatprep.subr.mxu0 0.0
  %162 = vmatpush2.msra.mxu0 0.0
  %163 = vmatprep.subr.mxu0 0.0
  %164 = vmatpush2.msra.mxu0 0.0
  %165 = vmatprep.subr.mxu0 0.0
  %166 = vmatpush2.msra.mxu0 0.0
  %167 = vmatprep.subr.mxu0 0.0
  %168 = vmatpush2.msra.mxu0 0.0
  %169 = vmatprep.mubr.f32.mxu0 0.0
  %170 = vmatmul.mubr.f32.gmra.mxu0 %v54
  %v171 = vpop.f32.mrf.mxu0
  %v172 = vadd.f32 %v50, %v171
  %v173 = vpop.f32.mrf.mxu0
  %174 = vmatprep.mubr.f32.mxu0 0.0
  %175 = vmatmul.mubr.f32.gmra.mxu0 %v57
  %v176 = vpop.f32.mrf.mxu0
  %v177 = vadd.f32 %v50, %v176
  %v178 = vpop.f32.mrf.mxu0
  %179 = vmatprep.mubr.f32.mxu0 0.0
  %180 = vmatmul.mubr.f32.gmra.mxu0 %v60
  %v181 = vpop.f32.mrf.mxu0
  %v182 = vadd.f32 %v50, %v181
  %v183 = vpop.f32.mrf.mxu0
  %184 = vmatprep.mubr.f32.mxu0 0.0
  %185 = vmatmul.mubr.f32.gmra.mxu0 %v63
  %v186 = vpop.f32.mrf.mxu0
  %v187 = vadd.f32 %v50, %v186
  %v188 = vpop.f32.mrf.mxu0
  %189 = vmatprep.mubr.f32.mxu0 0.0
  %190 = vmatmul.mubr.f32.gmra.mxu0 %v66
  %v191 = vpop.f32.mrf.mxu0
  %v192 = vadd.f32 %v50, %v191
  %v193 = vpop.f32.mrf.mxu0
  %194 = vmatprep.mubr.f32.mxu0 0.0
  %195 = vmatmul.mubr.f32.gmra.mxu0 %v69
  %v196 = vpop.f32.mrf.mxu0
  %v197 = vadd.f32 %v50, %v196
  %v198 = vpop.f32.mrf.mxu0
  %199 = vmatprep.mubr.f32.mxu0 0.0
  %200 = vmatmul.mubr.f32.gmra.mxu0 %v72
  %v201 = vpop.f32.mrf.mxu0
  %v202 = vadd.f32 %v50, %v201
  %v203 = vpop.f32.mrf.mxu0
  %204 = vmatprep.mubr.f32.mxu0 0.0
  %205 = vmatmul.mubr.f32.gmra.mxu0 %v75
  %v206 = vpop.f32.mrf.mxu0
  %v207 = vadd.f32 %v50, %v206
  %v208 = vpop.f32.mrf.mxu0
  %209 = vmatprep.mubr.f32.mxu0 0.0
  %210 = vmatmul.mubr.f32.gmra.mxu0 %v78
  %v211 = vpop.f32.mrf.mxu0
  %v212 = vadd.f32 %v50, %v211
  %v213 = vpop.f32.mrf.mxu0
  %214 = vmatprep.mubr.f32.mxu0 0.0
  %215 = vmatmul.mubr.f32.gmra.mxu0 %v81
  %v216 = vpop.f32.mrf.mxu0
  %v217 = vadd.f32 %v50, %v216
  %v218 = vpop.f32.mrf.mxu0
  %219 = vmatprep.mubr.f32.mxu0 0.0
  %220 = vmatmul.mubr.f32.gmra.mxu0 %v84
  %v221 = vpop.f32.mrf.mxu0
  %v222 = vadd.f32 %v50, %v221
  %v223 = vpop.f32.mrf.mxu0
  %224 = vmatprep.mubr.f32.mxu0 0.0
  %225 = vmatmul.mubr.f32.gmra.mxu0 %v87
  %v226 = vpop.f32.mrf.mxu0
  %v227 = vadd.f32 %v50, %v226
  %v228 = vpop.f32.mrf.mxu0
  %229 = vmatprep.mubr.f32.mxu0 0.0
  %230 = vmatmul.mubr.f32.gmra.mxu0 %v90
  %v231 = vpop.f32.mrf.mxu0
  %v232 = vadd.f32 %v50, %v231
  %v233 = vpop.f32.mrf.mxu0
  %234 = vmatprep.mubr.f32.mxu0 0.0
  %235 = vmatmul.mubr.f32.gmra.mxu0 %v93
  %v236 = vpop.f32.mrf.mxu0
  %v237 = vadd.f32 %v50, %v236
  %v238 = vpop.f32.mrf.mxu0
  %239 = vmatprep.mubr.f32.mxu0 0.0
  %240 = vmatmul.mubr.f32.gmra.mxu0 %v96
  %v241 = vpop.f32.mrf.mxu0
  %v242 = vadd.f32 %v50, %v241
  %v243 = vpop.f32.mrf.mxu0
  %244 = vmatprep.mubr.f32.mxu0 0.0
  %245 = vmatmul.mubr.f32.gmra.mxu0 %v99
  %v246 = vpop.f32.mrf.mxu0
  %v247 = vadd.f32 %v50, %v246
  %v248 = vpop.f32.mrf.mxu0
  %249 = vdwg.mxu0
  %v250 = vmax.f32 %v172, 0.0
  %v251 = vmax.f32 %v177, 0.0
  %v252 = vmax.f32 %v182, 0.0
  %v253 = vmax.f32 %v187, 0.0
  %v254 = vmax.f32 %v192, 0.0
  %v255 = vmax.f32 %v197, 0.0
  %v256 = vmax.f32 %v202, 0.0
  %v257 = vmax.f32 %v207, 0.0
  %v258 = vmax.f32 %v212, 0.0
  %v259 = vmax.f32 %v217, 0.0
  %v260 = vmax.f32 %v222, 0.0
  %v261 = vmax.f32 %v227, 0.0
  %v262 = vmax.f32 %v232, 0.0
  %v263 = vmax.f32 %v237, 0.0
  %v264 = vmax.f32 %v242, 0.0
  %v265 = vmax.f32 %v247, 0.0
  %v266 = vld [vmem:[%s3] sm:$0x1]
  %s267 = sld [smem:[#allocation2]]
  %v268 = vstv %s267
  %vm269 = vcmask 261120
  %v271 = vsel %vm269, %v266, 0
  %v274 = vsel %vm269, %v250, 0
  %v277 = vsel %vm269, %v251, 0
  %v280 = vsel %vm269, %v252, 0
  %v283 = vsel %vm269, %v253, 0
  %v286 = vsel %vm269, %v254, 0
  %v289 = vsel %vm269, %v255, 0
  %v292 = vsel %vm269, %v256, 0
  %v295 = vsel %vm269, %v257, 0
  %v298 = vsel %vm269, %v258, 0
  %v301 = vsel %vm269, %v259, 0
  %v304 = vsel %vm269, %v260, 0
  %v307 = vsel %vm269, %v261, 0
  %v310 = vsel %vm269, %v262, 0
  %v313 = vsel %vm269, %v263, 0
  %v316 = vsel %vm269, %v264, 0
  %v319 = vsel %vm269, %v265, 0
  %321 = vmatprep.subr.mxu0 0.0
  %322 = vmatpush1.xpose.msra.mxu0 %v319
  %323 = vmatprep.subr.mxu0 0.0
  %324 = vmatpush1.xpose.msra.mxu0 %v316
  %325 = vmatprep.subr.mxu0 0.0
  %326 = vmatpush1.xpose.msra.mxu0 %v313
  %327 = vmatprep.subr.mxu0 0.0
  %328 = vmatpush1.xpose.msra.mxu0 %v310
  %329 = vmatprep.subr.mxu0 0.0
  %330 = vmatpush1.xpose.msra.mxu0 %v307
  %331 = vmatprep.subr.mxu0 0.0
  %332 = vmatpush1.xpose.msra.mxu0 %v304
  %333 = vmatprep.subr.mxu0 0.0
  %334 = vmatpush1.xpose.msra.mxu0 %v301
  %335 = vmatprep.subr.mxu0 0.0
  %336 = vmatpush1.xpose.msra.mxu0 %v298
  %337 = vmatprep.subr.mxu0 0.0
  %338 = vmatpush1.xpose.msra.mxu0 %v295
  %339 = vmatprep.subr.mxu0 0.0
  %340 = vmatpush1.xpose.msra.mxu0 %v292
  %341 = vmatprep.subr.mxu0 0.0
  %342 = vmatpush1.xpose.msra.mxu0 %v289
  %343 = vmatprep.subr.mxu0 0.0
  %344 = vmatpush1.xpose.msra.mxu0 %v286
  %345 = vmatprep.subr.mxu0 0.0
  %346 = vmatpush1.xpose.msra.mxu0 %v283
  %347 = vmatprep.subr.mxu0 0.0
  %348 = vmatpush1.xpose.msra.mxu0 %v280
  %349 = vmatprep.subr.mxu0 0.0
  %350 = vmatpush1.xpose.msra.mxu0 %v277
  %351 = vmatprep.subr.mxu0 0.0
  %352 = vmatpush1.xpose.msra.mxu0 %v274
  %353 = vmatprep.subr.mxu0 0.0
  %354 = vmatpush2.xpose.msra.mxu0 0.0
  %355 = vmatprep.subr.mxu0 0.0
  %356 = vmatpush2.xpose.msra.mxu0 0.0
  %357 = vmatprep.subr.mxu0 0.0
  %358 = vmatpush2.xpose.msra.mxu0 0.0
  %359 = vmatprep.subr.mxu0 0.0
  %360 = vmatpush2.xpose.msra.mxu0 0.0
  %361 = vmatprep.subr.mxu0 0.0
  %362 = vmatpush2.xpose.msra.mxu0 0.0
  %363 = vmatprep.subr.mxu0 0.0
  %364 = vmatpush2.xpose.msra.mxu0 0.0
  %365 = vmatprep.subr.mxu0 0.0
  %366 = vmatpush2.xpose.msra.mxu0 0.0
  %367 = vmatprep.subr.mxu0 0.0
  %368 = vmatpush2.xpose.msra.mxu0 0.0
  %369 = vmatprep.subr.mxu0 0.0
  %370 = vmatpush2.xpose.msra.mxu0 0.0
  %371 = vmatprep.subr.mxu0 0.0
  %372 = vmatpush2.xpose.msra.mxu0 0.0
  %373 = vmatprep.subr.mxu0 0.0
  %374 = vmatpush2.xpose.msra.mxu0 0.0
  %375 = vmatprep.subr.mxu0 0.0
  %376 = vmatpush2.xpose.msra.mxu0 0.0
  %377 = vmatprep.subr.mxu0 0.0
  %378 = vmatpush2.xpose.msra.mxu0 0.0
  %379 = vmatprep.subr.mxu0 0.0
  %380 = vmatpush2.xpose.msra.mxu0 0.0
  %381 = vmatprep.subr.mxu0 0.0
  %382 = vmatpush2.xpose.msra.mxu0 0.0
  %383 = vmatprep.subr.mxu0 0.0
  %384 = vmatpush2.xpose.msra.mxu0 0.0
  %385 = vmatprep.mubr.f32.mxu0 0.0
  %386 = vmatmul.mubr.f32.gmra.mxu0 %v271
  %v387 = vpop.f32.mrf.mxu0
  %v388 = vadd.f32 %v268, %v387
  %v389 = vpop.f32.mrf.mxu0
  %390 = vdwg.mxu0
  %v391 = vsub.f32 0.0, %v388
  %v392 = vmul.f32 %v391, 1.442695
  %v393 = vpow.pop %v392
  %v394 = vadd.f32 %v393, 1.0
  %v395 = vrcp.pop %v394
  %v396 = vmul.f32 1.0, %v395
  %397 = vst [vmem:[%s5] sm:$0x1] %v396
  // Predicated region
  $region22: #{sonar_forward.1} parent=0 // pred_check
    _
  $region23: #{sonar_forward.1} parent=0 // pred_check_branch
    %399 = sbr.rel (0) target = $region25
  $region24: #{sonar_forward.1} parent=0 // pred_region
    _
  $region25: #{sonar_forward.1} parent=0 // pred_fallthru
    _
  // Predicated region
  $region26: #{sonar_forward.1} parent=0 // pred_check
    _
  $region27: #{sonar_forward.1} parent=0 // pred_check_branch
    %401 = sbr.rel (0) target = $region29
  $region28: #{sonar_forward.1} parent=0 // pred_region
    _
  $region29: #{sonar_forward.1} parent=0 // pred_fallthru
    _

</llo_original>
